<compile_context>
chip_gen: v7x
topology: tpu7x:2x2x1
jax: 0.10.0
libtpu: 0.0.40
codegen_flags: <defaults>
</compile_context>

<pallas_src>
import functools
import math

import jax
import jax.numpy as jnp
from jax.experimental import pallas as pl
from jax.experimental.pallas import tpu as pltpu

_LANE = 128
_DEFAULT_VMEM_CAPACITY = 64 * 1024 * 1024   # assume the small (v7x) part if unknown


def _vmem_capacity_bytes():
    try:
        return int(pltpu.get_tpu_info().vmem_capacity_bytes)
    except Exception:
        return _DEFAULT_VMEM_CAPACITY


def _vmem_plan():
    """(working-set budget, vmem_limit_bytes, looks-like-2TC-part) for this chip."""
    cap = _vmem_capacity_bytes()
    budget = max(8 << 20, int(0.40 * cap))               # ~26 MiB v7x, ~51 MiB v5e/v6e
    limit = int(min(cap - (12 << 20), budget + (16 << 20)))
    limit = max(limit, min(32 << 20, cap))
    multi_core = cap <= (80 << 20)                        # 64 MiB part => v7x (2 TCs)
    return budget, limit, multi_core


def _copy_concat_3d(channel_sizes, *refs):
    """refs = (*inputs, out); tiles are (bl, C_i, t) -> (bl, C_total, t)."""
    n = len(channel_sizes)
    in_refs, out_ref = refs[:n], refs[n]
    off = 0
    for r, c in zip(in_refs, channel_sizes):
        out_ref[:, off:off + c, :] = r[...].astype(out_ref.dtype)
        off += c


def _copy_concat_2d(widths, *refs):
    """refs = (*inputs, out); tiles are (bl, W_i) -> (bl, W_total), lane-dense."""
    n = len(widths)
    in_refs, out_ref = refs[:n], refs[n]
    off = 0
    for r, w in zip(in_refs, widths):
        out_ref[:, off:off + w] = r[...].astype(out_ref.dtype)
        off += w


def _dma_concat(xs3, channel_sizes, lead, trail, out_dtype):
    """HBM->HBM concat: one async DMA per input into its output channel slice.

    No VMEM staging and no vreg traffic (preferred on v7x where the staged
    copy's vld/vst + sublane realignment can bind before 3.2 TB/s HBM).
    Inputs must already have the output dtype (DMA cannot cast).
    """
    n = len(xs3)
    c_total = sum(channel_sizes)

    def kernel(*refs):
        in_refs, out_ref, sem = refs[:n], refs[n], refs[n + 1]
        copies = []
        off = 0
        for idx, (r, c) in enumerate(zip(in_refs, channel_sizes)):
            cp = pltpu.make_async_copy(r, out_ref.at[:, off:off + c, :], sem.at[idx])
            cp.start()
            copies.append(cp)
            off += c
        for cp in copies:
            cp.wait()

    return pl.pallas_call(
        kernel,
        out_shape=jax.ShapeDtypeStruct((lead, c_total, trail), out_dtype),
        in_specs=[pl.BlockSpec(memory_space=pl.ANY)] * n,
        out_specs=pl.BlockSpec(memory_space=pl.ANY),
        scratch_shapes=[pltpu.SemaphoreType.DMA((n,))],
    )(*xs3)


def fx_safe_concat(xs, dim, *, prefer_dma=False):
    """Pallas equivalent of FXSafeConcat.forward: torch.cat(tuple(xs), dim)."""
    xs = tuple(xs)
    nd = xs[0].ndim
    dim = dim % nd
    base_shape = tuple(xs[0].shape)
    out_dtype = jnp.result_type(*[x.dtype for x in xs])

    lead = int(math.prod(base_shape[:dim]))
    trail = int(math.prod(base_shape[dim + 1:]))
    c_total_all = sum(int(x.shape[dim]) for x in xs)
    out_shape = base_shape[:dim] + (c_total_all,) + base_shape[dim + 1:]

    # Drop zero-sized channel inputs; handle degenerate (empty) outputs.
    xs = tuple(x for x in xs if int(x.shape[dim]) != 0)
    if not xs or lead == 0 or trail == 0 or c_total_all == 0:
        return jnp.zeros(out_shape, out_dtype)
    if len(xs) == 1:
        return xs[0].astype(out_dtype)

    channel_sizes = tuple(int(x.shape[dim]) for x in xs)
    c_total = sum(channel_sizes)
    out_isz = jnp.dtype(out_dtype).itemsize
    in_isz = tuple(jnp.dtype(x.dtype).itemsize for x in xs)

    budget, vmem_limit, multi_core = _vmem_plan()

    # --- DMA-only HBM->HBM path (opt-in; see module comment). -----------------
    if prefer_dma and all(x.dtype == out_dtype for x in xs):
        xs3 = [x.reshape(lead, c, trail) for x, c in zip(xs, channel_sizes)]
        out3 = _dma_concat(xs3, channel_sizes, lead, trail, out_dtype)
        return out3.reshape(out_shape)

    # Channel offsets and their alignment w.r.t. the output's sublane packing
    # (8 rows for 32-bit, 16 for 16-bit, 32 for 8-bit dtypes).
    offs = []
    o = 0
    for c in channel_sizes:
        offs.append(o)
        o += c
    pack_rows = {1: 32, 2: 16, 4: 8}.get(out_isz, 8)
    aligned = all(off % pack_rows == 0 for off in offs)

    # --- Lane-flattened 2-D path: (lead, C_i*trail) -> (lead, C_total*trail). --
    # Used when trail is lane-sparse (< 128, incl. last-dim concat) or channel
    # offsets would force sublane-rotated / masked stores in the 3-D layout.
    if trail < _LANE or not aligned:
        widths = tuple(c * trail for c in channel_sizes)
        w_total = c_total * trail
        row_bytes = 2 * (sum(w * i for w, i in zip(widths, in_isz)) + w_total * out_isz)
        max_rows = budget // row_bytes
        if lead <= max_rows:
            bl = lead                          # full-dim block: always legal
        elif max_rows >= 8:
            bl = int(max_rows // 8) * 8        # keep the sublane block dim aligned
        else:
            bl = 0                             # does not fit; try the 3-D path below
        if bl > 0:
            xs2 = [x.reshape(lead, w) for x, w in zip(xs, widths)]
            out2 = pl.pallas_call(
                functools.partial(_copy_concat_2d, widths),
                out_shape=jax.ShapeDtypeStruct((lead, w_total), out_dtype),
                grid=(pl.cdiv(lead, bl),),
                in_specs=[pl.BlockSpec((bl, w), lambda i: (i, 0)) for w in widths],
                out_specs=pl.BlockSpec((bl, w_total), lambda i: (i, 0)),
                compiler_params=pltpu.CompilerParams(
                    dimension_semantics=("parallel",),
                    vmem_limit_bytes=vmem_limit,
                ),
            )(*xs2)
            return out2.reshape(out_shape)

    # --- General 3-D path: (lead, C_i, trail), 2-D grid over (lead, trail). ----
    # Per-step double-buffered bytes per (lead-row x lane) cell.
    cell_bytes = 2 * (sum(c * i for c, i in zip(channel_sizes, in_isz))
                      + c_total * out_isz)
    max_cells = budget // cell_bytes           # bound on bl * t
    t_min = trail if trail < _LANE else _LANE
    if max_cells < t_min:
        # TODO(synk): add a channel grid axis (per-input / C-chunks with static
        # offsets) so huge-channel concats stay in Pallas; defer to XLA for now.
        return jnp.concatenate([x.astype(out_dtype) for x in xs], axis=dim)

    if trail <= max_cells:
        t = trail                              # full-dim lane block: always legal
    else:
        t = max(_LANE, (min(max_cells, trail) // _LANE) * _LANE)
    bl = max(1, min(lead, max_cells // t))

    grid_l, grid_t = pl.cdiv(lead, bl), pl.cdiv(trail, t)
    # Only force a lead split on 2-TC parts (v7x) when the grid would otherwise
    # be a single block; on single-TC v5e/v6e splitting is pure overhead.
    if multi_core and grid_l * grid_t < 2 and lead > 1:
        bl = pl.cdiv(lead, 2)
        grid_l = pl.cdiv(lead, bl)

    xs3 = [x.reshape(lead, c, trail) for x, c in zip(xs, channel_sizes)]
    # TODO(synk): for many-input concats, sweep pipeline_mode=pl.Buffered(3) on
    # the input specs (pure-DMA pipeline; extra buffer can hide issue latency).
    out3 = pl.pallas_call(
        functools.partial(_copy_concat_3d, channel_sizes),
        out_shape=jax.ShapeDtypeStruct((lead, c_total, trail), out_dtype),
        grid=(grid_l, grid_t),
        in_specs=[pl.BlockSpec((bl, c, t), lambda i, j: (i, 0, j))
                  for c in channel_sizes],
        out_specs=pl.BlockSpec((bl, c_total, t), lambda i, j: (i, 0, j)),
        compiler_params=pltpu.CompilerParams(
            dimension_semantics=("parallel", "parallel"),
            vmem_limit_bytes=vmem_limit,
        ),
    )(*xs3)
    return out3.reshape(out_shape)


if __name__ == "__main__":
    key = jax.random.PRNGKey(0)
    keys = jax.random.split(key, 8)

    # Case 1: YOLOv8-style NCHW concat along channels, offsets not 8-aligned
    # (exercises the lane-flattened 2-D path). Includes a zero-channel input.
    x1 = jax.random.normal(keys[0], (2, 4, 16, 16), dtype=jnp.float32)
    x2 = jax.random.normal(keys[1], (2, 6, 16, 16), dtype=jnp.float32)
    x0 = jnp.zeros((2, 0, 16, 16), dtype=jnp.float32)
    out1 = jax.block_until_ready(fx_safe_concat([x1, x0, x2], dim=1))
    ref1 = jnp.concatenate([x1, x0, x2], axis=1)
    assert out1.shape == ref1.shape and jnp.array_equal(out1, ref1), "case 1"

    # Case 2: sublane-aligned channel counts, lane-wide trail (3-D path).
    a = jax.random.normal(keys[2], (2, 8, 16, 16), dtype=jnp.float32)
    b = jax.random.normal(keys[3], (2, 16, 16, 16), dtype=jnp.float32)
    out2 = jax.block_until_ready(fx_safe_concat([a, b], dim=1))
    ref2 = jnp.concatenate([a, b], axis=1)
    assert out2.shape == ref2.shape and jnp.array_equal(out2, ref2), "case 2"

    # Case 3: three inputs, odd channel counts and spatial extents.
    y1 = jax.random.normal(keys[4], (2, 3, 9, 15), dtype=jnp.float32)
    y2 = jax.random.normal(keys[5], (2, 7, 9, 15), dtype=jnp.float32)
    y3 = jax.random.normal(keys[6], (2, 2, 9, 15), dtype=jnp.float32)
    out3 = jax.block_until_ready(fx_safe_concat([y1, y2, y3], dim=1))
    ref3 = jnp.concatenate([y1, y2, y3], axis=1)
    assert out3.shape == ref3.shape and jnp.array_equal(out3, ref3), "case 3"

    # Case 4: concat along the last dim (trail == 1, lane-flattened 2-D path).
    p = jax.random.normal(keys[7], (2, 5, 8), dtype=jnp.float32)
    q = jax.random.normal(keys[0], (2, 5, 3), dtype=jnp.float32)
    out4 = jax.block_until_ready(fx_safe_concat([p, q], dim=-1))
    ref4 = jnp.concatenate([p, q], axis=-1)
    assert out4.shape == ref4.shape and jnp.array_equal(out4, ref4), "case 4"

    # Case 5: mixed dtypes (bf16 + f32 -> f32 promotion inside the kernel).
    m = jax.random.normal(keys[1], (2, 4, 8, 8), dtype=jnp.bfloat16)
    f = jax.random.normal(keys[2], (2, 4, 8, 8), dtype=jnp.float32)
    out5 = jax.block_until_ready(fx_safe_concat([m, f], dim=1))
    ref5 = jnp.concatenate([m, f], axis=1)
    assert out5.shape == ref5.shape and jnp.array_equal(out5, ref5), "case 5"

    # Soft-qualify the DMA-only HBM->HBM path (preferred on v7x); any failure
    # here is non-fatal so the portable staged path is never put at risk.
    try:
        out_dma = jax.block_until_ready(fx_safe_concat([a, b], dim=1, prefer_dma=True))
        assert jnp.array_equal(out_dma, ref2)
    except Exception:
        # TODO(synk): qualify strided-destination HBM DMA per generation before
        # enabling prefer_dma by default on v7x.
        pass

    print("KERNEL_OK")
</pallas_src>

<mosaic_0001>
module attributes {stable_mosaic.version = 11 : i64} {
  func.func @_copy_concat_2d(%arg0: i32, %arg1: memref<2x1024xf32, #tpu.memory_space<vmem>>, %arg2: memref<2x1536xf32, #tpu.memory_space<vmem>>, %arg3: memref<2x2560xf32, #tpu.memory_space<vmem>>) attributes {dimension_semantics = [#tpu.dimension_semantics<parallel>], iteration_bounds = array<i64: 1>, scalar_prefetch = 0 : i64, scratch_operands = 0 : i64, tpu.core_type = #tpu.core_type<tc>, window_params = [{transform_indices = @transform_0, window_bounds = array<i64: 2, 1024>}, {transform_indices = @transform_1, window_bounds = array<i64: 2, 1536>}, {transform_indices = @transform_2, window_bounds = array<i64: 2, 2560>}]} {
    %c0 = arith.constant 0 : index
    %c0_0 = arith.constant 0 : index
    %0 = vector.load %arg1[%c0, %c0_0] : memref<2x1024xf32, #tpu.memory_space<vmem>>, vector<2x1024xf32>
    %c0_1 = arith.constant 0 : index
    %c0_2 = arith.constant 0 : index
    %1 = vector.load %arg3[%c0_1, %c0_2] : memref<2x2560xf32, #tpu.memory_space<vmem>>, vector<2x1024xf32>
    tpu.vector_store %arg3[%c0_1, %c0_2], %0 {strides = array<i32>} : memref<2x2560xf32, #tpu.memory_space<vmem>>, vector<2x1024xf32>,
    %c0_3 = arith.constant 0 : index
    %c0_4 = arith.constant 0 : index
    %2 = vector.load %arg2[%c0_3, %c0_4] : memref<2x1536xf32, #tpu.memory_space<vmem>>, vector<2x1536xf32>
    %c0_5 = arith.constant 0 : index
    %c1024 = arith.constant 1024 : index
    %3 = vector.load %arg3[%c0_5, %c1024] : memref<2x2560xf32, #tpu.memory_space<vmem>>, vector<2x1536xf32>
    tpu.vector_store %arg3[%c0_5, %c1024], %2 {strides = array<i32>} : memref<2x2560xf32, #tpu.memory_space<vmem>>, vector<2x1536xf32>,
    return
  }
  func.func @transform_0(%arg0: i32) -> (i32, i32) {
    %c0_i32 = arith.constant 0 : i32
    %c0_i32_0 = arith.constant 0 : i32
    return %arg0, %c0_i32 : i32, i32
  }
  func.func @transform_1(%arg0: i32) -> (i32, i32) {
    %c0_i32 = arith.constant 0 : i32
    %c0_i32_0 = arith.constant 0 : i32
    return %arg0, %c0_i32 : i32, i32
  }
  func.func @transform_2(%arg0: i32) -> (i32, i32) {
    %c0_i32 = arith.constant 0 : i32
    %c0_i32_0 = arith.constant 0 : i32
    return %arg0, %c0_i32 : i32, i32
  }
}

</mosaic_0001>

<llo_original>
// kernel: tpu_custom_call.1
$region0: #{tpu_custom_call.1}
  #allocation0 [shape = 'u32[]', space=smem, size = 0x4, offset = 0x4, fixed_abs, tag = 'smem constant byte address 0x4 - core index']
  #allocation1 [shape = 'u32[144,128]{1,0:T(1,128)}', space=vmem, size = 0x12000, scoped, tag = 'internal scratch']
  %s0 = inlined_call_operand.hbm [shape: f32[2,1024], index: 0, kind: input, shape index: {}]
  %s1 = inlined_call_operand.hbm [shape: f32[2,1536], index: 1, kind: input, shape index: {}]
  %s2 = inlined_call_operand.hbm [shape: f32[2,2560], index: 2, kind: output, shape index: {}]
  %s3 = sld [smem:[#allocation0]]
  $region26: #{tpu_custom_call.1} parent=0
    _
  %s5 = ssub.s32 1, %s3
  %s6 = scalar_select 0, %s5, %s3
  $region1: #{tpu_custom_call.1} parent=0
    #allocation2 [shape = 'u8[8192]{0}', space=vmem, size = 0x2000, scoped, tag = 'input window, operand 0, single buffered']
    #allocation3 [shape = 's32[1]{0}', space=sflag, size = 0x4, scoped, tag = 'scoped memory for tpu_custom_call.1']
    #allocation4 [shape = 's32[1]{0}', space=sflag, size = 0x4, scoped, tag = 'scoped memory for tpu_custom_call.1']
    #allocation5 [shape = 'u8[12288]{0}', space=vmem, size = 0x3000, scoped, tag = 'input window, operand 1, single buffered']
    #allocation6 [shape = 's32[1]{0}', space=sflag, size = 0x4, scoped, tag = 'scoped memory for tpu_custom_call.1']
    #allocation7 [shape = 'u8[20480]{0}', space=vmem, size = 0x5000, scoped, tag = 'output window, operand 0, single buffered']
    %7 = vsyncpa [#allocation3], 0
    %8 = vsyncpa [#allocation6], 0
    %9 = vsyncpa [#allocation4], 0
    // Predicated region
    $region2: #{tpu_custom_call.1} parent=1 // pred_check
      _
    $region3: #{tpu_custom_call.1} parent=1 // pred_check_branch
      %11 = sbr.rel (0) target = $region5
    $region4: #{tpu_custom_call.1} parent=1 // pred_region
      %s13 = ssub.s32 256, 256
      %14 = vsyncadd [#allocation3], %s13
      %s16 = sshll.u32 [#allocation2], 4
      %s17 = int_to_ptr.vmem [resolvable:$true] %s16
      %19 = dma.hbm_to_vmem [thread:$0]  %s0, 256, %s17, [#allocation3]
    $region5: #{tpu_custom_call.1} parent=1 // pred_fallthru
      _
    // Predicated region
    $region6: #{tpu_custom_call.1} parent=1 // pred_check
      _
    $region7: #{tpu_custom_call.1} parent=1 // pred_check_branch
      %21 = sbr.rel (0) target = $region9
    $region8: #{tpu_custom_call.1} parent=1 // pred_region
      %s23 = ssub.s32 384, 384
      %24 = vsyncadd [#allocation6], %s23
      %s26 = sshll.u32 [#allocation5], 4
      %s27 = int_to_ptr.vmem [resolvable:$true] %s26
      %29 = dma.hbm_to_vmem [thread:$0]  %s1, 384, %s27, [#allocation6]
    $region9: #{tpu_custom_call.1} parent=1 // pred_fallthru
      _
    // Predicated region
    $region10: #{tpu_custom_call.1} parent=1 // pred_check
      _
    $region11: #{tpu_custom_call.1} parent=1 // pred_check_branch
      %31 = sbr.rel (0) target = $region13
    $region12: #{tpu_custom_call.1} parent=1 // pred_region
      %32 = dma.done [#allocation3], 256
    $region13: #{tpu_custom_call.1} parent=1 // pred_fallthru
      _
    // Predicated region
    $region14: #{tpu_custom_call.1} parent=1 // pred_check
      _
    $region15: #{tpu_custom_call.1} parent=1 // pred_check_branch
      %34 = sbr.rel (0) target = $region17
    $region16: #{tpu_custom_call.1} parent=1 // pred_region
      %35 = dma.done [#allocation6], 384
    $region17: #{tpu_custom_call.1} parent=1 // pred_fallthru
      _
    %v36 = vld [vmem:[#allocation2] sm:$0xff]
    %v37 = vld [vmem:[#allocation2 + $0x8] sm:$0xff]
    %38 = vst [vmem:[#allocation7] sm:$0xff] %v36
    %39 = vst [vmem:[#allocation7 + $0x8] sm:$0xff] %v37
    %v40 = vld [vmem:[#allocation5] sm:$0xff]
    %v41 = vld [vmem:[#allocation5 + $0x8] sm:$0xff]
    %v42 = vld [vmem:[#allocation5 + $0x10] sm:$0xff]
    %43 = vst [vmem:[#allocation7 + $0x10] sm:$0xff] %v40
    %44 = vst [vmem:[#allocation7 + $0x18] sm:$0xff] %v41
    %45 = vst [vmem:[#allocation7 + $0x20] sm:$0xff] %v42
    // Predicated region
    $region18: #{tpu_custom_call.1} parent=1 // pred_check
      _
    $region19: #{tpu_custom_call.1} parent=1 // pred_check_branch
      %47 = sbr.rel (0) target = $region21
    $region20: #{tpu_custom_call.1} parent=1 // pred_region
      %s49 = ssub.s32 640, 640
      %50 = vsyncadd [#allocation4], %s49
      %s52 = sshll.u32 [#allocation7], 4
      %s53 = int_to_ptr.vmem [resolvable:$true] %s52
      %55 = dma.vmem_to_hbm [thread:$0]  %s53, 640, %s2, [#allocation4]
    $region21: #{tpu_custom_call.1} parent=1 // pred_fallthru
      _
    // Predicated region
    $region22: #{tpu_custom_call.1} parent=1 // pred_check
      _
    $region23: #{tpu_custom_call.1} parent=1 // pred_check_branch
      %57 = sbr.rel (0) target = $region25
    $region24: #{tpu_custom_call.1} parent=1 // pred_region
      %58 = dma.done [#allocation4], 640
    $region25: #{tpu_custom_call.1} parent=1 // pred_fallthru
      _
    %59 = vsyncpa [#allocation3], 1
    %60 = vsyncpa [#allocation6], 1
    %61 = vsyncpa [#allocation4], 1

</llo_original>
